<compile_context>
chip_gen: v7x
topology: tpu7x:2x2x1
jax: 0.10.0
libtpu: 0.0.40
codegen_flags: <defaults>
</compile_context>

<pallas_src>
import jax
import jax.numpy as jnp
from jax.experimental import pallas as pl
from jax.experimental.pallas import tpu as pltpu

TM_MAX = 512      # max row tile for the patch-matmul kernel
EPS = 1e-3        # BasicConv2d uses nn.BatchNorm2d(..., eps=0.001)


def _round_up(x, m):
    return ((x + m - 1) // m) * m


def _cdiv(a, b):
    return (a + b - 1) // b


# ---------------------------------------------------------------------------
# Pallas kernels
# ---------------------------------------------------------------------------
def _matmul_scale_bias_relu_kernel(p_ref, w_ref, scale_ref, bias_ref, o_ref):
    # p_ref: (tm, Kp) bf16 patches, w_ref: (Kp, tn) bf16,
    # scale_ref/bias_ref: (1, tn) f32 (inference BN).  MXU accumulates in f32;
    # the epilogue applies the per-channel scale, bias and ReLU in f32.
    acc = jnp.dot(p_ref[...], w_ref[...], preferred_element_type=jnp.float32)
    o_ref[...] = jnp.maximum(acc * scale_ref[...] + bias_ref[...],
                             0.0).astype(o_ref.dtype)


def _maxpool_kernel(x_ref, o_ref):
    # x_ref: (9, tr, 128) -> elementwise max over the 9 window taps
    o_ref[...] = jnp.max(x_ref[...], axis=0)


# ---------------------------------------------------------------------------
# Fused matmul + BN(inference) + ReLU wrapper
# ---------------------------------------------------------------------------
def _matmul_scale_bias_relu(patches, w_mat, scale, bias, out_dtype):
    """patches: [M, K], w_mat: [K, Cout], scale/bias: [1, Cout] f32.
    Returns relu((patches @ w_mat) * scale + bias) as [M, Cout] in out_dtype."""
    M, K = patches.shape
    Cout = w_mat.shape[1]

    # bf16 operands (cast BEFORE zero-padding so the pad/concat glue moves half
    # the bytes); f32 accumulation + f32 epilogue inside the kernel.
    patches = patches.astype(jnp.bfloat16)
    w_mat = w_mat.astype(jnp.bfloat16)
    scale = scale.astype(jnp.float32)
    bias = bias.astype(jnp.float32)

    # Pad K to a multiple of 128 so the contraction stays lane-dense (matters
    # for the 1x1 stems where K = Cin is tiny).
    Kp = _round_up(max(K, 128), 128)
    if Kp != K:
        patches = jnp.pad(patches, ((0, 0), (0, Kp - K)))
        w_mat = jnp.pad(w_mat, ((0, Kp - K), (0, 0)))

    # Row tiling: round M up only to the bf16 sublane multiple (16); cap tiles
    # at TM_MAX and keep padding minimal when multiple row tiles are needed.
    n_row_tiles = _cdiv(M, TM_MAX)
    tm = _round_up(_cdiv(M, n_row_tiles), 16)
    Mp = tm * n_row_tiles
    if Mp != M:
        patches = jnp.pad(patches, ((0, Mp - M), (0, 0)))

    # Cout tiling: 256-wide tiles drive the full 256-column MXU on v6e/v7x;
    # fall back to 128 (Cout=384) or the full Cout.
    if Cout % 256 == 0:
        tn = 256
    elif Cout % 128 == 0:
        tn = 128
    else:
        tn = Cout

    grid_m, grid_n = Mp // tm, Cout // tn
    # v7x has 2 TensorCores: keep the number of "parallel" grid steps even so
    # neither core idles (and give single-tile matmuls >= 2 steps).  tm stays a
    # multiple of 16 (bf16 sublane packing).
    total = grid_m * grid_n
    if total % 2 == 1 and tm % 32 == 0 and (total > 1 or tm >= 64):
        tm //= 2
        grid_m *= 2

    out_itemsize = jnp.dtype(out_dtype).itemsize
    bytes_accessed = (Mp * Kp * 2                 # patches (bf16)
                      + Kp * Cout * 2 * grid_m    # weights re-streamed per row tile
                      + Cout * 4 * 2              # scale + bias
                      + Mp * Cout * out_itemsize) # output

    out = pl.pallas_call(
        _matmul_scale_bias_relu_kernel,
        out_shape=jax.ShapeDtypeStruct((Mp, Cout), out_dtype),
        grid_spec=pltpu.PrefetchScalarGridSpec(
            num_scalar_prefetch=0,
            grid=(grid_m, grid_n),
            in_specs=[
                pl.BlockSpec((tm, Kp), lambda i, j: (i, 0)),
                pl.BlockSpec((Kp, tn), lambda i, j: (0, j)),
                pl.BlockSpec((1, tn), lambda i, j: (0, j)),
                pl.BlockSpec((1, tn), lambda i, j: (0, j)),
            ],
            out_specs=pl.BlockSpec((tm, tn), lambda i, j: (i, j)),
        ),
        compiler_params=pltpu.CompilerParams(
            dimension_semantics=("parallel", "parallel")),
        cost_estimate=pl.CostEstimate(
            flops=2 * Mp * Kp * Cout,
            transcendentals=0,
            bytes_accessed=int(bytes_accessed)),
    )(patches, w_mat, scale, bias)

    return out[:M]


def _bn_fold(p):
    """Return (scale, bias) of shape (1, Cout) for inference-mode BN."""
    gamma, beta, mean, var = p["gamma"], p["beta"], p["mean"], p["var"]
    inv_std = 1.0 / jnp.sqrt(var + EPS)
    scale = (gamma * inv_std).reshape(1, -1)
    bias = (beta - mean * gamma * inv_std).reshape(1, -1)
    return scale, bias


# ---------------------------------------------------------------------------
# Conv / pool wrappers
# ---------------------------------------------------------------------------
def conv_bn_relu(x, p, *, stride=1, padding=0, out_dtype=None):
    """General BasicConv2d: x [N,H,W,Cin] NHWC, PyTorch weight (Cout,Cin,kh,kw)."""
    w = p["w"]
    if out_dtype is None:
        out_dtype = x.dtype
    x = x.astype(jnp.bfloat16)          # halves im2col bytes; MXU is bf16 anyway
    N, H, W, Cin = x.shape
    Cout, _, kh, kw = w.shape

    if padding:
        x = jnp.pad(x, ((0, 0), (padding, padding), (padding, padding), (0, 0)))
    Hp, Wp = x.shape[1], x.shape[2]
    Ho = (Hp - kh) // stride + 1
    Wo = (Wp - kw) // stride + 1

    # TODO(synk): for production H/W, replace wrapper-side im2col with an
    # in-kernel reduction over the kh*kw taps (grid axis marked "arbitrary" +
    # f32 VMEM accumulator) to cut activation HBM traffic ~9x.
    cols = []
    for i in range(kh):
        for j in range(kw):
            cols.append(
                x[:, i:i + stride * (Ho - 1) + 1:stride,
                     j:j + stride * (Wo - 1) + 1:stride, :])
    K = kh * kw * Cin
    M = N * Ho * Wo
    patches = jnp.concatenate(cols, axis=-1).reshape(M, K)

    w_mat = jnp.transpose(w, (2, 3, 1, 0)).reshape(K, Cout)
    scale, bias = _bn_fold(p)

    out = _matmul_scale_bias_relu(patches, w_mat, scale, bias, out_dtype)
    return out.reshape(N, Ho, Wo, Cout)


def fused_stems_1x1(x, p_list, out_dtype):
    """The three branch-stem 1x1 convs share input & patches -> one wide matmul."""
    x = x.astype(jnp.bfloat16)
    N, H, W, Cin = x.shape
    M = N * H * W
    patches = x.reshape(M, Cin)

    w_mats, scales, biases, couts = [], [], [], []
    for p in p_list:
        w = p["w"]                              # (Cout, Cin, 1, 1)
        Cout = w.shape[0]
        w_mats.append(jnp.transpose(w, (2, 3, 1, 0)).reshape(Cin, Cout))
        s, b = _bn_fold(p)
        scales.append(s)
        biases.append(b)
        couts.append(Cout)

    w_cat = jnp.concatenate(w_mats, axis=1)          # (Cin, sum Cout)
    scale_cat = jnp.concatenate(scales, axis=1)
    bias_cat = jnp.concatenate(biases, axis=1)

    out = _matmul_scale_bias_relu(patches, w_cat, scale_cat, bias_cat, out_dtype)

    outs, off = [], 0
    for c in couts:
        outs.append(out[:, off:off + c].reshape(N, H, W, c))
        off += c
    return outs


def maxpool3x3_s2(x):
    """x: [N, H, W, C] -> MaxPool2d(kernel=3, stride=2, padding=0)."""
    N, H, W, C = x.shape
    Ho = (H - 3) // 2 + 1
    Wo = (W - 3) // 2 + 1
    taps = []
    for i in range(3):
        for j in range(3):
            taps.append(x[:, i:i + 2 * (Ho - 1) + 1:2,
                             j:j + 2 * (Wo - 1) + 1:2, :])
    M = N * Ho * Wo
    T = M * C
    flat = jnp.stack(taps, axis=0).reshape(9, T)

    # Lane-dense layout: the max over taps is purely elementwise, so flatten
    # (rows, channels) and tile the flat axis as (*, 128) -> unmasked full-lane
    # stores regardless of C; padded tail is sliced off afterwards.
    LANES = 128
    rows = _round_up(_cdiv(T, LANES), 8)
    tr = min(512, rows)
    rows_p = _round_up(rows, tr)
    Tp = rows_p * LANES
    if Tp != T:
        flat = jnp.pad(flat, ((0, 0), (0, Tp - T)))
    stacked = flat.reshape(9, rows_p, LANES)

    out = pl.pallas_call(
        _maxpool_kernel,
        out_shape=jax.ShapeDtypeStruct((rows_p, LANES), x.dtype),
        grid_spec=pltpu.PrefetchScalarGridSpec(
            num_scalar_prefetch=0,
            grid=(rows_p // tr,),
            in_specs=[pl.BlockSpec((9, tr, LANES), lambda i: (0, i, 0))],
            out_specs=pl.BlockSpec((tr, LANES), lambda i: (i, 0)),
        ),
        compiler_params=pltpu.CompilerParams(
            dimension_semantics=("parallel",)),
        cost_estimate=pl.CostEstimate(
            flops=9 * rows_p * LANES,
            transcendentals=0,
            bytes_accessed=int(10 * rows_p * LANES * x.dtype.itemsize)),
    )(stacked)
    return out.reshape(-1)[:T].reshape(N, Ho, Wo, C)


# ---------------------------------------------------------------------------
# Parameter init (deterministic, synthetic)
# ---------------------------------------------------------------------------
def init_basic_conv(key, cin, cout, k):
    kw_, kg, kb, km, kv = jax.random.split(key, 5)
    fan_in = cin * k * k
    return {
        "w": jax.random.normal(kw_, (cout, cin, k, k), jnp.float32) / jnp.sqrt(fan_in),
        "gamma": jax.random.uniform(kg, (cout,), jnp.float32, 0.5, 1.5),
        "beta": jax.random.normal(kb, (cout,), jnp.float32) * 0.1,
        "mean": jax.random.normal(km, (cout,), jnp.float32) * 0.1,
        "var": jax.random.uniform(kv, (cout,), jnp.float32, 0.5, 1.5),
    }


def init_reduction_b(key, in_channels):
    ks = jax.random.split(key, 7)
    return {
        "b1_0": init_basic_conv(ks[0], in_channels, 256, 1),
        "b1_1": init_basic_conv(ks[1], 256, 384, 3),
        "b2_0": init_basic_conv(ks[2], in_channels, 256, 1),
        "b2_1": init_basic_conv(ks[3], 256, 256, 3),
        "b3_0": init_basic_conv(ks[4], in_channels, 256, 1),
        "b3_1": init_basic_conv(ks[5], 256, 256, 3),
        "b3_2": init_basic_conv(ks[6], 256, 256, 3),
    }


# ---------------------------------------------------------------------------
# ReductionB forward (Pallas)
# ---------------------------------------------------------------------------
def reduction_b_forward(params, x_nchw):
    x = jnp.transpose(x_nchw, (0, 2, 3, 1))  # -> NHWC
    final_dtype = x.dtype
    act_dtype = jnp.bfloat16                 # bf16 intermediates (halve HBM traffic)

    # The three 1x1 stems share one wide fused matmul kernel (Cout = 768).
    s1, s2, s3 = fused_stems_1x1(
        x, [params["b1_0"], params["b2_0"], params["b3_0"]], out_dtype=act_dtype)

    b1 = conv_bn_relu(s1, params["b1_1"], stride=2, out_dtype=final_dtype)
    b2 = conv_bn_relu(s2, params["b2_1"], stride=2, out_dtype=final_dtype)
    b3 = conv_bn_relu(
        conv_bn_relu(s3, params["b3_1"], padding=1, out_dtype=act_dtype),
        params["b3_2"], stride=2, out_dtype=final_dtype)
    b4 = maxpool3x3_s2(x)

    out = jnp.concatenate([b1, b2, b3, b4], axis=-1)  # channel-concat (NHWC)
    return jnp.transpose(out, (0, 3, 1, 2))           # back to NCHW


# ---------------------------------------------------------------------------
# Pure-JAX reference (for correctness check)
# ---------------------------------------------------------------------------
def _ref_bc(x, p, stride, padding):
    y = jax.lax.conv_general_dilated(
        x, p["w"], (stride, stride), [(padding, padding)] * 2,
        dimension_numbers=("NCHW", "OIHW", "NCHW"))
    inv_std = 1.0 / jnp.sqrt(p["var"] + EPS)
    scale = (p["gamma"] * inv_std).reshape(1, -1, 1, 1)
    bias = (p["beta"] - p["mean"] * p["gamma"] * inv_std).reshape(1, -1, 1, 1)
    return jnp.maximum(y * scale + bias, 0.0)


def reduction_b_reference(params, x):
    b1 = _ref_bc(_ref_bc(x, params["b1_0"], 1, 0), params["b1_1"], 2, 0)
    b2 = _ref_bc(_ref_bc(x, params["b2_0"], 1, 0), params["b2_1"], 2, 0)
    b3 = _ref_bc(_ref_bc(_ref_bc(x, params["b3_0"], 1, 0), params["b3_1"], 1, 1),
                 params["b3_2"], 2, 0)
    b4 = jax.lax.reduce_window(x, -jnp.inf, jax.lax.max,
                               (1, 1, 3, 3), (1, 1, 2, 2), "VALID")
    return jnp.concatenate([b1, b2, b3, b4], axis=1)


# ---------------------------------------------------------------------------
if __name__ == "__main__":
    key = jax.random.PRNGKey(0)
    k_param, k_x = jax.random.split(key)

    N, C_IN, H, W = 2, 8, 11, 11
    x = jax.random.normal(k_x, (N, C_IN, H, W), jnp.float32)
    params = init_reduction_b(k_param, C_IN)

    out = reduction_b_forward(params, x)
    out = jax.block_until_ready(out)

    ref = reduction_b_reference(params, x)

    expected_shape = (N, 384 + 256 + 256 + C_IN, (H - 3) // 2 + 1, (W - 3) // 2 + 1)
    assert out.shape == expected_shape, (out.shape, expected_shape)
    assert bool(jnp.all(jnp.isfinite(out)))
    # bf16 operands/intermediates with f32 accumulation and f32 BN epilogue ->
    # compare against the fp32 reference with a bf16-appropriate tolerance.
    assert bool(jnp.allclose(out, ref, rtol=5e-2, atol=5e-2)), (
        float(jnp.max(jnp.abs(out - ref))))

    print("KERNEL_OK")
</pallas_src>

<mosaic_0001>
module attributes {stable_mosaic.version = 11 : i64} {
  func.func @_matmul_scale_bias_relu_kernel(%arg0: i32, %arg1: i32, %arg2: memref<128x128xbf16, #tpu.memory_space<vmem>>, %arg3: memref<128x256xbf16, #tpu.memory_space<vmem>>, %arg4: memref<1x256xf32, #tpu.memory_space<vmem>>, %arg5: memref<1x256xf32, #tpu.memory_space<vmem>>, %arg6: memref<128x256xbf16, #tpu.memory_space<vmem>>) attributes {dimension_semantics = [#tpu.dimension_semantics<parallel>, #tpu.dimension_semantics<parallel>], iteration_bounds = array<i64: 2, 3>, scalar_prefetch = 0 : i64, scratch_operands = 0 : i64, tpu.core_type = #tpu.core_type<tc>, window_params = [{transform_indices = @transform_0, window_bounds = array<i64: 128, 128>}, {transform_indices = @transform_1, window_bounds = array<i64: 128, 256>}, {transform_indices = @transform_2, window_bounds = array<i64: 1, 256>}, {transform_indices = @transform_3, window_bounds = array<i64: 1, 256>}, {transform_indices = @transform_4, window_bounds = array<i64: 128, 256>}]} {
    %c0 = arith.constant 0 : index
    %c0_0 = arith.constant 0 : index
    %0 = vector.load %arg2[%c0, %c0_0] : memref<128x128xbf16, #tpu.memory_space<vmem>>, vector<128x128xbf16>
    %c0_1 = arith.constant 0 : index
    %c0_2 = arith.constant 0 : index
    %1 = vector.load %arg3[%c0_1, %c0_2] : memref<128x256xbf16, #tpu.memory_space<vmem>>, vector<128x256xbf16>
    %cst = arith.constant dense<0.000000e+00> : vector<128x256xf32>
    %2 = tpu.matmul %0, %1, %cst {dimension_numbers = #tpu.dot_dimension_numbers<[1], [0], [0], [1], [0, 0, 1, 1], [], []>} : vector<128x128xbf16>, vector<128x256xbf16>, vector<128x256xf32> -> vector<128x256xf32>
    %c0_3 = arith.constant 0 : index
    %c0_4 = arith.constant 0 : index
    %3 = vector.load %arg4[%c0_3, %c0_4] : memref<1x256xf32, #tpu.memory_space<vmem>>, vector<1x256xf32>
    %4 = vector.broadcast %3 : vector<1x256xf32> to vector<128x256xf32>
    %5 = arith.mulf %2, %4 : vector<128x256xf32>
    %c0_5 = arith.constant 0 : index
    %c0_6 = arith.constant 0 : index
    %6 = vector.load %arg5[%c0_5, %c0_6] : memref<1x256xf32, #tpu.memory_space<vmem>>, vector<1x256xf32>
    %7 = vector.broadcast %6 : vector<1x256xf32> to vector<128x256xf32>
    %8 = arith.addf %5, %7 : vector<128x256xf32>
    %cst_7 = arith.constant 0.000000e+00 : f32
    %9 = vector.broadcast %cst_7 : f32 to vector<128x256xf32>
    %10 = arith.maximumf %8, %9 : vector<128x256xf32>
    %11 = arith.truncf %10 : vector<128x256xf32> to vector<128x256xbf16>
    %c0_8 = arith.constant 0 : index
    %c0_9 = arith.constant 0 : index
    %12 = vector.load %arg6[%c0_8, %c0_9] : memref<128x256xbf16, #tpu.memory_space<vmem>>, vector<128x256xbf16>
    tpu.vector_store %arg6[%c0_8, %c0_9], %11 {strides = array<i32>} : memref<128x256xbf16, #tpu.memory_space<vmem>>, vector<128x256xbf16>,
    return
  }
  func.func @transform_0(%arg0: i32, %arg1: i32) -> (i32, i32) {
    %c0_i32 = arith.constant 0 : i32
    %c0_i32_0 = arith.constant 0 : i32
    return %arg0, %c0_i32 : i32, i32
  }
  func.func @transform_1(%arg0: i32, %arg1: i32) -> (i32, i32) {
    %c0_i32 = arith.constant 0 : i32
    %c0_i32_0 = arith.constant 0 : i32
    return %c0_i32, %arg1 : i32, i32
  }
  func.func @transform_2(%arg0: i32, %arg1: i32) -> (i32, i32) {
    %c0_i32 = arith.constant 0 : i32
    %c0_i32_0 = arith.constant 0 : i32
    return %c0_i32, %arg1 : i32, i32
  }
  func.func @transform_3(%arg0: i32, %arg1: i32) -> (i32, i32) {
    %c0_i32 = arith.constant 0 : i32
    %c0_i32_0 = arith.constant 0 : i32
    return %c0_i32, %arg1 : i32, i32
  }
  func.func @transform_4(%arg0: i32, %arg1: i32) -> (i32, i32) {
    %c0_i32 = arith.constant 0 : i32
    return %arg0, %arg1 : i32, i32
  }
}

</mosaic_0001>

<llo_original>
// kernel: tpu_custom_call.1
$region0: #{tpu_custom_call.1}
  #allocation0 [shape = 'u32[]', space=smem, size = 0x4, offset = 0x4, fixed_abs, tag = 'smem constant byte address 0x4 - core index']
  #allocation1 [shape = 'u32[144,128]{1,0:T(1,128)}', space=vmem, size = 0x12000, scoped, tag = 'internal scratch']
  %s0 = inlined_call_operand.hbm [shape: bf16[256,128], index: 0, kind: input, shape index: {}]
  %s1 = inlined_call_operand.hbm [shape: bf16[128,768], index: 1, kind: input, shape index: {}]
  %s2 = inlined_call_operand.vmem [shape: f32[1,768], index: 2, kind: input, shape index: {}]
  %s3 = inlined_call_operand.hbm [shape: f32[1,768], index: 3, kind: input, shape index: {}]
  %s4 = inlined_call_operand.hbm [shape: bf16[256,768], index: 4, kind: output, shape index: {}]
  %s5 = sld [smem:[#allocation0]]
  $region61: #{tpu_custom_call.1} parent=0
    _
  %s7 = ssub.s32 1, %s5
  %s8 = scalar_select 0, %s7, %s5
  $region1: #{tpu_custom_call.1} parent=0
    #allocation2 [shape = 'u8[65536]{0}', space=vmem, size = 0x10000, scoped, tag = 'input window, operand 0']
    #allocation3 [shape = 's32[2]{0}', space=sflag, size = 0x8, scoped, tag = 'scoped memory for tpu_custom_call.1']
    #allocation4 [shape = 's32[2]{0}', space=sflag, size = 0x8, scoped, tag = 'scoped memory for tpu_custom_call.1']
    #allocation5 [shape = 'u8[131072]{0}', space=vmem, size = 0x20000, scoped, tag = 'input window, operand 1']
    #allocation6 [shape = 's32[2]{0}', space=sflag, size = 0x8, scoped, tag = 'scoped memory for tpu_custom_call.1']
    #allocation7 [shape = 'u8[2048]{0}', space=vmem, size = 0x800, scoped, tag = 'input window, operand 3']
    #allocation8 [shape = 'u8[131072]{0}', space=vmem, size = 0x20000, scoped, tag = 'output window, operand 0']
    %9 = vsyncpa [#allocation3], 0
    %s10 = scalar_lea.sflag [#allocation3], 1
    %11 = vsyncpa %s10, 0
    %12 = vsyncpa [#allocation6], 0
    %s13 = scalar_lea.sflag [#allocation6], 1
    %14 = vsyncpa %s13, 0
    %15 = vsyncpa [#allocation4], 0
    %s16 = scalar_lea.sflag [#allocation4], 1
    %17 = vsyncpa %s16, 0
    loop: start=0, step=1, limit=8
    $region2: #{tpu_custom_call.1} parent=1 // loop_pre_header
      _
    $region3: #{tpu_custom_call.1} parent=1 // loop_header
      %s19 = sphi 0, %s23
      %p20 = scmp.ge.s32.totalorder %s19, 8
      %s26 = sphi 0, %s38
      %s27 = sphi 0, %s34
      %s28 = sphi 0, %s26
      %s29 = sphi 0, %s27
      %s30 = sphi 0, %s28
      %s31 = sphi 0, %s29
      %s41 = sphi 0, %s43
      %s44 = sphi 0, %s41
      %s45 = sphi 0, %s44
      %s61 = sphi 0, %s45
      %s67 = sphi 0, %s69
      %s70 = sphi 0, %s67
      %s71 = sphi 0, %s70
      %s87 = sphi 0, %s71
      %s93 = sphi 0, %s95
      %s96 = sphi 0, %s93
      %s97 = sphi 0, %s96
      %s113 = sphi 0, %s97
      %s119 = sphi 0, %s121
      %s122 = sphi 0, %s119
      %s123 = sphi 0, %s122
      %s139 = sphi 0, %s123
      %s147 = sphi 0, %s149
      %s150 = sphi 0, %s147
      %s151 = sphi 0, %s150
      %s167 = sphi 0, %s151
    $region4: #{tpu_custom_call.1} parent=1 // loop_header_branch
      %22 = sbr.rel (%p20) target = $region8
    $region5: #{tpu_custom_call.1} parent=1 // loop_body
      %s24 = ssub.s32 %s19, 1
      %s25 = ssub.s32 %s19, 2
      %s32 = sadd.s32 1, %s27
      %p33 = scmp.ge.s32.totalorder %s32, 3
      %s34 = scalar_select %p33, 0, %s32
      %s35 = sadd.s32 1, %s26
      %s36 = scalar_select %p33, %s35, %s26
      %p37 = scmp.ge.s32.totalorder %s36, 2
      %s38 = scalar_select %p37, 0, %s36
      %s39 = ssub.s32 %s26, %s38
      %p40 = scmp.eq.s32.totalorder %s39, 0
      %s42 = sadd.s32 %s41, 1
      %s43 = scalar_select %p40, %s41, %s42
      %p46 = pneg %p40
      %p47 = scmp.eq.s32.totalorder %s19, 5
      %p48 = por %p46, %p47
      %p49 = scmp.ne.s32.totalorder %s41, %s44
      %p50 = scmp.eq.s32.totalorder %s19, 0
      %p51 = por %p49, %p50
      %p52 = scmp.ne.s32.totalorder %s41, %s44
      %p53 = scmp.eq.s32.totalorder %s24, 5
      %p54 = por %p52, %p53
      %p55 = scmp.ne.s32.totalorder %s44, %s45
      %p56 = scmp.eq.s32.totalorder %s24, 0
      %p57 = por %p55, %p56
      %p58 = scmp.ne.s32.totalorder %s44, %s45
      %p59 = scmp.eq.s32.totalorder %s25, 5
      %p60 = por %p58, %p59
      %p62 = scmp.ne.s32.totalorder %s45, %s61
      %p63 = scmp.eq.s32.totalorder %s25, 0
      %p64 = por %p62, %p63
      %s65 = ssub.s32 %s27, %s34
      %p66 = scmp.eq.s32.totalorder %s65, 0
      %s68 = sadd.s32 %s67, 1
      %s69 = scalar_select %p66, %s67, %s68
      %p72 = pneg %p66
      %p73 = scmp.eq.s32.totalorder %s19, 5
      %p74 = por %p72, %p73
      %p75 = scmp.ne.s32.totalorder %s67, %s70
      %p76 = scmp.eq.s32.totalorder %s19, 0
      %p77 = por %p75, %p76
      %p78 = scmp.ne.s32.totalorder %s67, %s70
      %p79 = scmp.eq.s32.totalorder %s24, 5
      %p80 = por %p78, %p79
      %p81 = scmp.ne.s32.totalorder %s70, %s71
      %p82 = scmp.eq.s32.totalorder %s24, 0
      %p83 = por %p81, %p82
      %p84 = scmp.ne.s32.totalorder %s70, %s71
      %p85 = scmp.eq.s32.totalorder %s25, 5
      %p86 = por %p84, %p85
      %p88 = scmp.ne.s32.totalorder %s71, %s87
      %p89 = scmp.eq.s32.totalorder %s25, 0
      %p90 = por %p88, %p89
      %s91 = ssub.s32 %s27, %s34
      %p92 = scmp.eq.s32.totalorder %s91, 0
      %s94 = sadd.s32 %s93, 1
      %s95 = scalar_select %p92, %s93, %s94
      %p98 = pneg %p92
      %p99 = scmp.eq.s32.totalorder %s19, 5
      %p100 = por %p98, %p99
      %p101 = scmp.ne.s32.totalorder %s93, %s96
      %p102 = scmp.eq.s32.totalorder %s19, 0
      %p103 = por %p101, %p102
      %p104 = scmp.ne.s32.totalorder %s93, %s96
      %p105 = scmp.eq.s32.totalorder %s24, 5
      %p106 = por %p104, %p105
      %p107 = scmp.ne.s32.totalorder %s96, %s97
      %p108 = scmp.eq.s32.totalorder %s24, 0
      %p109 = por %p107, %p108
      %p110 = scmp.ne.s32.totalorder %s96, %s97
      %p111 = scmp.eq.s32.totalorder %s25, 5
      %p112 = por %p110, %p111
      %p114 = scmp.ne.s32.totalorder %s97, %s113
      %p115 = scmp.eq.s32.totalorder %s25, 0
      %p116 = por %p114, %p115
      %s117 = ssub.s32 %s27, %s34
      %p118 = scmp.eq.s32.totalorder %s117, 0
      %s120 = sadd.s32 %s119, 1
      %s121 = scalar_select %p118, %s119, %s120
      %p124 = pneg %p118
      %p125 = scmp.eq.s32.totalorder %s19, 5
      %p126 = por %p124, %p125
      %p127 = scmp.ne.s32.totalorder %s119, %s122
      %p128 = scmp.eq.s32.totalorder %s19, 0
      %p129 = por %p127, %p128
      %p130 = scmp.ne.s32.totalorder %s119, %s122
      %p131 = scmp.eq.s32.totalorder %s24, 5
      %p132 = por %p130, %p131
      %p133 = scmp.ne.s32.totalorder %s122, %s123
      %p134 = scmp.eq.s32.totalorder %s24, 0
      %p135 = por %p133, %p134
      %p136 = scmp.ne.s32.totalorder %s122, %s123
      %p137 = scmp.eq.s32.totalorder %s25, 5
      %p138 = por %p136, %p137
      %p140 = scmp.ne.s32.totalorder %s123, %s139
      %p141 = scmp.eq.s32.totalorder %s25, 0
      %p142 = por %p140, %p141
      %s143 = ssub.s32 %s26, %s38
      %s144 = ssub.s32 %s27, %s34
      %s145 = sor.u32 %s143, %s144
      %p146 = scmp.eq.s32.totalorder %s145, 0
      %s148 = sadd.s32 %s147, 1
      %s149 = scalar_select %p146, %s147, %s148
      %p152 = pneg %p146
      %p153 = scmp.eq.s32.totalorder %s19, 5
      %p154 = por %p152, %p153
      %p155 = scmp.ne.s32.totalorder %s147, %s150
      %p156 = scmp.eq.s32.totalorder %s19, 0
      %p157 = por %p155, %p156
      %p158 = scmp.ne.s32.totalorder %s147, %s150
      %p159 = scmp.eq.s32.totalorder %s24, 5
      %p160 = por %p158, %p159
      %p161 = scmp.ne.s32.totalorder %s150, %s151
      %p162 = scmp.eq.s32.totalorder %s24, 0
      %p163 = por %p161, %p162
      %p164 = scmp.ne.s32.totalorder %s150, %s151
      %p165 = scmp.eq.s32.totalorder %s25, 5
      %p166 = por %p164, %p165
      %p168 = scmp.ne.s32.totalorder %s151, %s167
      %p169 = scmp.eq.s32.totalorder %s25, 0
      %p170 = por %p168, %p169
      %p171 = scmp.le.s32.totalorder 1, %s19
      %p172 = scmp.lt.s32.totalorder %s19, 7
      %p173 = pnand %p171, %p172
      %p174 = pneg %p173
      // Predicated region
      $region9: #{tpu_custom_call.1} parent=5 // pred_check
        _
      $region10: #{tpu_custom_call.1} parent=5 // pred_check_branch
        %176 = sbr.rel (%p173) target = $region12
      $region11: #{tpu_custom_call.1} parent=5 // pred_region
        %s177 = ssub.s32 %s19, 1
      $region12: #{tpu_custom_call.1} parent=5 // pred_fallthru
        _
      %p178 = scmp.lt.s32.totalorder %s19, 6
      // Predicated region
      $region13: #{tpu_custom_call.1} parent=5 // pred_check
        %p179 = pneg %p178
      $region14: #{tpu_custom_call.1} parent=5 // pred_check_branch
        %181 = sbr.rel (%p179) target = $region16
      $region15: #{tpu_custom_call.1} parent=5 // pred_region
        // Predicated region
        $region17: #{tpu_custom_call.1} parent=15 // pred_check
          %p182 = pneg %p51
        $region18: #{tpu_custom_call.1} parent=15 // pred_check_branch
          %184 = sbr.rel (%p182) target = $region20
        $region19: #{tpu_custom_call.1} parent=15 // pred_region
          %s185 = sand.u32 %s41, 1
          %s186 = scalar_lea.sflag [#allocation3], %s185
          %s187 = sand.u32 %s41, 1
          %s188 = smul.addr %s187, 64
          %s189 = scalar_lea.vmem [#allocation2], %s188
          %s190 = smul.u32 16, %s26
          %s192 = ssub.s32 1024, 1024
          %193 = vsyncadd %s186, %s192
          %s194 = smul.addr %s190, 64
          %s195 = scalar_lea.hbm %s0, %s194
          %s196 = sshll.u32 %s189, 4
          %s197 = int_to_ptr.vmem [resolvable:$true] %s196
          %202 = dma.hbm_to_vmem [thread:$0]  %s195, 1024, %s197, %s186, 64, 64, 4
        $region20: #{tpu_custom_call.1} parent=15 // pred_fallthru
          _
        // Predicated region
        $region21: #{tpu_custom_call.1} parent=15 // pred_check
          %p203 = pneg %p77
        $region22: #{tpu_custom_call.1} parent=15 // pred_check_branch
          %205 = sbr.rel (%p203) target = $region24
        $region23: #{tpu_custom_call.1} parent=15 // pred_region
          %s206 = sand.u32 %s19, 1
          %s207 = scalar_lea.sflag [#allocation6], %s206
          %s208 = sand.u32 %s67, 1
          %s209 = smul.addr %s208, 128
          %s210 = scalar_lea.vmem [#allocation5], %s209
          %s211 = smul.u32 2, %s27
          %s213 = ssub.s32 2048, 2048
          %214 = vsyncadd %s207, %s213
          %s215 = smul.addr %s211, 64
          %s216 = scalar_lea.hbm %s1, %s215
          %s217 = sshll.u32 %s210, 4
          %s218 = int_to_ptr.vmem [resolvable:$true] %s217
          %223 = dma.hbm_to_vmem [thread:$0]  %s216, 2048, %s218, %s207, 384, 128, 8
        $region24: #{tpu_custom_call.1} parent=15 // pred_fallthru
          _
        // Predicated region
        $region25: #{tpu_custom_call.1} parent=15 // pred_check
          %p224 = pneg %p103
        $region26: #{tpu_custom_call.1} parent=15 // pred_check_branch
          %226 = sbr.rel (%p224) target = $region28
        $region27: #{tpu_custom_call.1} parent=15 // pred_region
          %s227 = smul.u32 2, %s27
          %p228 = scmp.lt.s32.totalorder %s227, 5
          %s229 = scalar_select %p228, %s227, 5
          %s230 = scalar_lea.vmem %s2, %s229
          %s231 = smul.u32 2, %s27
        $region28: #{tpu_custom_call.1} parent=15 // pred_fallthru
          _
        // Predicated region
        $region29: #{tpu_custom_call.1} parent=15 // pred_check
          %p232 = pneg %p129
        $region30: #{tpu_custom_call.1} parent=15 // pred_check_branch
          %234 = sbr.rel (%p232) target = $region32
        $region31: #{tpu_custom_call.1} parent=15 // pred_region
          %s235 = sand.u32 %s19, 1
          %s236 = scalar_lea.sflag [#allocation6], %s235
          %s237 = sand.u32 %s119, 1
          %s238 = smul.addr %s237, 2
          %s239 = scalar_lea.vmem [#allocation7], %s238
          %s240 = smul.u32 2, %s27
          %s242 = ssub.s32 32, 32
          %243 = vsyncadd %s236, %s242
          %s244 = smul.addr %s240, 16
          %s245 = scalar_lea.hbm %s3, %s244
          %s247 = sshll.u32 %s239, 4
          %s248 = int_to_ptr.vmem [resolvable:$true] %s247
          %250 = dma.hbm_to_vmem [thread:$0]  %s245, 32, %s248, %s236
        $region32: #{tpu_custom_call.1} parent=15 // pred_fallthru
          _
      $region16: #{tpu_custom_call.1} parent=5 // pred_fallthru
        _
      %p251 = scmp.le.s32.totalorder 1, %s19
      %p252 = scmp.lt.s32.totalorder %s19, 7
      %p253 = pnand %p251, %p252
      %p254 = pneg %p253
      // Predicated region
      $region33: #{tpu_custom_call.1} parent=5 // pred_check
        _
      $region34: #{tpu_custom_call.1} parent=5 // pred_check_branch
        %256 = sbr.rel (%p253) target = $region36
      $region35: #{tpu_custom_call.1} parent=5 // pred_region
        %s257 = ssub.s32 %s19, 1
        %s258 = sand.u32 %s44, 1
        %s259 = scalar_lea.sflag [#allocation3], %s258
        %s260 = sand.u32 %s44, 1
        %s261 = smul.addr %s260, 64
        %s262 = scalar_lea.vmem [#allocation2], %s261
        // Predicated region
        $region37: #{tpu_custom_call.1} parent=35 // pred_check
          %p263 = pneg %p57
        $region38: #{tpu_custom_call.1} parent=35 // pred_check_branch
          %265 = sbr.rel (%p263) target = $region40
        $region39: #{tpu_custom_call.1} parent=35 // pred_region
          %266 = dma.done %s259, 1024
        $region40: #{tpu_custom_call.1} parent=35 // pred_fallthru
          _
        %s267 = sand.u32 %s24, 1
        %s268 = scalar_lea.sflag [#allocation6], %s267
        %s269 = sand.u32 %s70, 1
        %s270 = smul.addr %s269, 128
        %s271 = scalar_lea.vmem [#allocation5], %s270
        // Predicated region
        $region41: #{tpu_custom_call.1} parent=35 // pred_check
          %p272 = pneg %p83
        $region42: #{tpu_custom_call.1} parent=35 // pred_check_branch
          %274 = sbr.rel (%p272) target = $region44
        $region43: #{tpu_custom_call.1} parent=35 // pred_region
          %275 = dma.done %s268, 2048
        $region44: #{tpu_custom_call.1} parent=35 // pred_fallthru
          _
        %s276 = sand.u32 %s24, 1
        %s277 = scalar_lea.sflag [#allocation6], %s276
        %s278 = sand.u32 %s122, 1
        %s279 = smul.addr %s278, 2
        %s280 = scalar_lea.vmem [#allocation7], %s279
        // Predicated region
        $region45: #{tpu_custom_call.1} parent=35 // pred_check
          %p281 = pneg %p135
        $region46: #{tpu_custom_call.1} parent=35 // pred_check_branch
          %283 = sbr.rel (%p281) target = $region48
        $region47: #{tpu_custom_call.1} parent=35 // pred_region
          %284 = dma.done %s277, 32
        $region48: #{tpu_custom_call.1} parent=35 // pred_fallthru
          _
        %s285 = sand.u32 %s44, 1
        %s286 = scalar_lea.sflag [#allocation3], %s285
        %s287 = sand.u32 %s44, 1
        %s288 = smul.addr %s287, 64
        %s289 = scalar_lea.vmem [#allocation2], %s288
        %p290 = pneg %p57
        %p291 = pneg %p54
        %s292 = sand.u32 %s24, 1
        %s293 = scalar_lea.sflag [#allocation6], %s292
        %s294 = sand.u32 %s70, 1
        %s295 = smul.addr %s294, 128
        %s296 = scalar_lea.vmem [#allocation5], %s295
        %p297 = pneg %p83
        %p298 = pneg %p80
        %s299 = smul.u32 2, %s29
        %p300 = scmp.lt.s32.totalorder %s299, 5
        %s301 = scalar_select %p300, %s299, 5
        %s302 = scalar_lea.vmem %s2, %s301
        %p303 = pneg %p109
        %p304 = pneg %p106
        %s305 = sand.u32 %s24, 1
        %s306 = scalar_lea.sflag [#allocation6], %s305
        %s307 = sand.u32 %s122, 1
        %s308 = smul.addr %s307, 2
        %s309 = scalar_lea.vmem [#allocation7], %s308
        %p310 = pneg %p135
        %p311 = pneg %p132
        %p312 = pneg %p163
        %p313 = pneg %p160
        %s314 = sand.u32 %s150, 1
        %s315 = scalar_lea.sflag [#allocation4], %s314
        %s316 = sand.u32 %s150, 1
        %s317 = smul.addr %s316, 128
        %s318 = scalar_lea.vmem [#allocation8], %s317
        %s319 = smul.u32 16, %s28
        %s320 = smul.u32 2, %s29
        %s321 = smul.u32 2, %s29
        %p322 = scmp.lt.s32.totalorder %s321, 5
        %s323 = scalar_select %p322, %s321, 5
        %s324 = scalar_lea.vmem %s2, %s323
        %s325 = smul.u32 2, %s29
        %s326 = smul.u32 2, %s29
        %s327 = smul.u32 16, %s28
        %s328 = smul.u32 2, %s29
        %v330 = vld [vmem:[%s262] sm:$0xf]
        %v331 = vld [vmem:[%s262 + $0x4] sm:$0xf]
        %v332 = vld [vmem:[%s262 + $0x8] sm:$0xf]
        %v333 = vld [vmem:[%s262 + $0xc] sm:$0xf]
        %v334 = vld [vmem:[%s262 + $0x10] sm:$0xf]
        %v335 = vld [vmem:[%s262 + $0x14] sm:$0xf]
        %v336 = vld [vmem:[%s262 + $0x18] sm:$0xf]
        %v337 = vld [vmem:[%s262 + $0x1c] sm:$0xf]
        %v338 = vld [vmem:[%s262 + $0x20] sm:$0xf]
        %v339 = vld [vmem:[%s262 + $0x24] sm:$0xf]
        %v340 = vld [vmem:[%s262 + $0x28] sm:$0xf]
        %v341 = vld [vmem:[%s262 + $0x2c] sm:$0xf]
        %v342 = vld [vmem:[%s262 + $0x30] sm:$0xf]
        %v343 = vld [vmem:[%s262 + $0x34] sm:$0xf]
        %v344 = vld [vmem:[%s262 + $0x38] sm:$0xf]
        %v345 = vld [vmem:[%s262 + $0x3c] sm:$0xf]
        %v346 = vld [vmem:[%s271] sm:$0xff]
        %v347 = vld [vmem:[%s271 + $0x8] sm:$0xff]
        %v348 = vld [vmem:[%s271 + $0x10] sm:$0xff]
        %v349 = vld [vmem:[%s271 + $0x18] sm:$0xff]
        %v350 = vld [vmem:[%s271 + $0x20] sm:$0xff]
        %v351 = vld [vmem:[%s271 + $0x28] sm:$0xff]
        %v352 = vld [vmem:[%s271 + $0x30] sm:$0xff]
        %v353 = vld [vmem:[%s271 + $0x38] sm:$0xff]
        %v354 = vld [vmem:[%s271 + $0x40] sm:$0xff]
        %v355 = vld [vmem:[%s271 + $0x48] sm:$0xff]
        %v356 = vld [vmem:[%s271 + $0x50] sm:$0xff]
        %v357 = vld [vmem:[%s271 + $0x58] sm:$0xff]
        %v358 = vld [vmem:[%s271 + $0x60] sm:$0xff]
        %v359 = vld [vmem:[%s271 + $0x68] sm:$0xff]
        %v360 = vld [vmem:[%s271 + $0x70] sm:$0xff]
        %v361 = vld [vmem:[%s271 + $0x78] sm:$0xff]
        %v378 = vunpack.c.l.b16 %v330
        %v379 = vunpack.c.l.b16 %v331
        %v380 = vunpack.c.l.b16 %v332
        %v381 = vunpack.c.l.b16 %v333
        %v382 = vunpack.c.l.b16 %v334
        %v383 = vunpack.c.l.b16 %v335
        %v384 = vunpack.c.l.b16 %v336
        %v385 = vunpack.c.l.b16 %v337
        %v386 = vunpack.c.l.b16 %v338
        %v387 = vunpack.c.l.b16 %v339
        %v388 = vunpack.c.l.b16 %v340
        %v389 = vunpack.c.l.b16 %v341
        %v390 = vunpack.c.l.b16 %v342
        %v391 = vunpack.c.l.b16 %v343
        %v392 = vunpack.c.l.b16 %v344
        %v393 = vunpack.c.l.b16 %v345
        %v394 = vpack.c.b16 %v379, %v378
        %v395 = vpack.c.b16 %v381, %v380
        %v396 = vpack.c.b16 %v383, %v382
        %v397 = vpack.c.b16 %v385, %v384
        %v398 = vpack.c.b16 %v387, %v386
        %v399 = vpack.c.b16 %v389, %v388
        %v400 = vpack.c.b16 %v391, %v390
        %v401 = vpack.c.b16 %v393, %v392
        %v426 = vunpack.c.l.b16 %v346
        %v427 = vunpack.c.h.b16 %v346
        %v428 = vunpack.c.l.b16 %v347
        %v429 = vunpack.c.h.b16 %v347
        %v430 = vunpack.c.l.b16 %v348
        %v431 = vunpack.c.h.b16 %v348
        %v432 = vunpack.c.l.b16 %v349
        %v433 = vunpack.c.h.b16 %v349
        %v434 = vunpack.c.l.b16 %v350
        %v435 = vunpack.c.h.b16 %v350
        %v436 = vunpack.c.l.b16 %v351
        %v437 = vunpack.c.h.b16 %v351
        %v438 = vunpack.c.l.b16 %v352
        %v439 = vunpack.c.h.b16 %v352
        %v440 = vunpack.c.l.b16 %v353
        %v441 = vunpack.c.h.b16 %v353
        %v442 = vunpack.c.l.b16 %v354
        %v443 = vunpack.c.h.b16 %v354
        %v444 = vunpack.c.l.b16 %v355
        %v445 = vunpack.c.h.b16 %v355
        %v446 = vunpack.c.l.b16 %v356
        %v447 = vunpack.c.h.b16 %v356
        %v448 = vunpack.c.l.b16 %v357
        %v449 = vunpack.c.h.b16 %v357
        %v450 = vunpack.c.l.b16 %v358
        %v451 = vunpack.c.h.b16 %v358
        %v452 = vunpack.c.l.b16 %v359
        %v453 = vunpack.c.h.b16 %v359
        %v454 = vunpack.c.l.b16 %v360
        %v455 = vunpack.c.h.b16 %v360
        %v456 = vunpack.c.l.b16 %v361
        %v457 = vunpack.c.h.b16 %v361
        %v458 = vpack.c.b16 %v428, %v426
        %v459 = vpack.c.b16 %v429, %v427
        %v460 = vpack.c.b16 %v432, %v430
        %v461 = vpack.c.b16 %v433, %v431
        %v462 = vpack.c.b16 %v436, %v434
        %v463 = vpack.c.b16 %v437, %v435
        %v464 = vpack.c.b16 %v440, %v438
        %v465 = vpack.c.b16 %v441, %v439
        %v466 = vpack.c.b16 %v444, %v442
        %v467 = vpack.c.b16 %v445, %v443
        %v468 = vpack.c.b16 %v448, %v446
        %v469 = vpack.c.b16 %v449, %v447
        %v470 = vpack.c.b16 %v452, %v450
        %v471 = vpack.c.b16 %v453, %v451
        %v472 = vpack.c.b16 %v456, %v454
        %v473 = vpack.c.b16 %v457, %v455
        %490 = vmatprep.subr.bf16.mxu0 %v459
        %491 = vmatpush1.bf16.msra.mxu0 %v458
        %492 = vmatprep.subr.bf16.mxu0 %v461
        %493 = vmatpush1.bf16.msra.mxu0 %v460
        %494 = vmatprep.subr.bf16.mxu0 %v463
        %495 = vmatpush1.bf16.msra.mxu0 %v462
        %496 = vmatprep.subr.bf16.mxu0 %v465
        %497 = vmatpush1.bf16.msra.mxu0 %v464
        %498 = vmatprep.subr.bf16.mxu0 %v467
        %499 = vmatpush1.bf16.msra.mxu0 %v466
        %500 = vmatprep.subr.bf16.mxu0 %v469
        %501 = vmatpush1.bf16.msra.mxu0 %v468
        %502 = vmatprep.subr.bf16.mxu0 %v471
        %503 = vmatpush1.bf16.msra.mxu0 %v470
        %504 = vmatprep.subr.bf16.mxu0 %v473
        %505 = vmatpush1.bf16.msra.mxu0 %v472
        %506 = vmatprep.subr.bf16.mxu0 0
        %507 = vmatpush1.bf16.msra.mxu0 0
        %508 = vmatprep.subr.bf16.mxu0 0
        %509 = vmatpush1.bf16.msra.mxu0 0
        %510 = vmatprep.subr.bf16.mxu0 0
        %511 = vmatpush1.bf16.msra.mxu0 0
        %512 = vmatprep.subr.bf16.mxu0 0
        %513 = vmatpush1.bf16.msra.mxu0 0
        %514 = vmatprep.subr.bf16.mxu0 0
        %515 = vmatpush1.bf16.msra.mxu0 0
        %516 = vmatprep.subr.bf16.mxu0 0
        %517 = vmatpush1.bf16.msra.mxu0 0
        %518 = vmatprep.subr.bf16.mxu0 0
        %519 = vmatpush1.bf16.msra.mxu0 0
        %520 = vmatprep.subr.bf16.mxu0 0
        %521 = vmatpush1.bf16.msra.mxu0 0
        %522 = vmatprep.mubr.bf16.mxu0 0
        %523 = vmatmul.mubr.bf16.gmra.mrb[0].mxu0 %v394
        %v524 = vpop.f32.mrb[0].mxu0
        %v525 = vadd.f32 0.0, %v524
        %v526 = vpop.f32.mrb[0].mxu0
        %v527 = vadd.f32 0.0, %v526
        %v528 = vpop.f32.mrb[0].mxu0
        %v529 = vadd.f32 0.0, %v528
        %v530 = vpop.f32.mrb[0].mxu0
        %v531 = vadd.f32 0.0, %v530
        %532 = vmatprep.mubr.bf16.mxu0 0
        %533 = vmatmul.mubr.bf16.gmra.mrb[0].mxu0 %v395
        %v534 = vpop.f32.mrb[0].mxu0
        %v535 = vadd.f32 0.0, %v534
        %v536 = vpop.f32.mrb[0].mxu0
        %v537 = vadd.f32 0.0, %v536
        %v538 = vpop.f32.mrb[0].mxu0
        %v539 = vadd.f32 0.0, %v538
        %v540 = vpop.f32.mrb[0].mxu0
        %v541 = vadd.f32 0.0, %v540
        %542 = vmatprep.mubr.bf16.mxu0 0
        %543 = vmatmul.mubr.bf16.gmra.mrb[0].mxu0 %v396
        %v544 = vpop.f32.mrb[0].mxu0
        %v545 = vadd.f32 0.0, %v544
        %v546 = vpop.f32.mrb[0].mxu0
        %v547 = vadd.f32 0.0, %v546
        %v548 = vpop.f32.mrb[0].mxu0
        %v549 = vadd.f32 0.0, %v548
        %v550 = vpop.f32.mrb[0].mxu0
        %v551 = vadd.f32 0.0, %v550
        %552 = vmatprep.mubr.bf16.mxu0 0
        %553 = vmatmul.mubr.bf16.gmra.mrb[0].mxu0 %v397
        %v554 = vpop.f32.mrb[0].mxu0
        %v555 = vadd.f32 0.0, %v554
        %v556 = vpop.f32.mrb[0].mxu0
        %v557 = vadd.f32 0.0, %v556
        %v558 = vpop.f32.mrb[0].mxu0
        %v559 = vadd.f32 0.0, %v558
        %v560 = vpop.f32.mrb[0].mxu0
        %v561 = vadd.f32 0.0, %v560
        %562 = vmatprep.mubr.bf16.mxu0 0
        %563 = vmatmul.mubr.bf16.gmra.mrb[0].mxu0 %v398
        %v564 = vpop.f32.mrb[0].mxu0
        %v565 = vadd.f32 0.0, %v564
        %v566 = vpop.f32.mrb[0].mxu0
        %v567 = vadd.f32 0.0, %v566
        %v568 = vpop.f32.mrb[0].mxu0
        %v569 = vadd.f32 0.0, %v568
        %v570 = vpop.f32.mrb[0].mxu0
        %v571 = vadd.f32 0.0, %v570
        %572 = vmatprep.mubr.bf16.mxu0 0
        %573 = vmatmul.mubr.bf16.gmra.mrb[0].mxu0 %v399
        %v574 = vpop.f32.mrb[0].mxu0
        %v575 = vadd.f32 0.0, %v574
        %v576 = vpop.f32.mrb[0].mxu0
        %v577 = vadd.f32 0.0, %v576
        %v578 = vpop.f32.mrb[0].mxu0
        %v579 = vadd.f32 0.0, %v578
        %v580 = vpop.f32.mrb[0].mxu0
        %v581 = vadd.f32 0.0, %v580
        %582 = vmatprep.mubr.bf16.mxu0 0
        %583 = vmatmul.mubr.bf16.gmra.mrb[0].mxu0 %v400
        %v584 = vpop.f32.mrb[0].mxu0
        %v585 = vadd.f32 0.0, %v584
        %v586 = vpop.f32.mrb[0].mxu0
        %v587 = vadd.f32 0.0, %v586
        %v588 = vpop.f32.mrb[0].mxu0
        %v589 = vadd.f32 0.0, %v588
        %v590 = vpop.f32.mrb[0].mxu0
        %v591 = vadd.f32 0.0, %v590
        %592 = vmatprep.mubr.bf16.mxu0 0
        %593 = vmatmul.mubr.bf16.gmra.mrb[0].mxu0 %v401
        %v594 = vpop.f32.mrb[0].mxu0
        %v595 = vadd.f32 0.0, %v594
        %v596 = vpop.f32.mrb[0].mxu0
        %v597 = vadd.f32 0.0, %v596
        %v598 = vpop.f32.mrb[0].mxu0
        %v599 = vadd.f32 0.0, %v598
        %v600 = vpop.f32.mrb[0].mxu0
        %v601 = vadd.f32 0.0, %v600
        %602 = vdwg.mxu0
        %v603 = vld [vmem:[%s324] sm:$0x3]
        %v605 = vlaneseq
        %v606 = vshrl.u32 %v605, 7
        %v607 = vsub.s32 0, %v606
        %v608 = vrot.slane %v603, %v607
        %v609 = vlaneseq
        %v610 = vshrl.u32 %v609, 7
        %v611 = vsub.s32 1, %v610
        %v612 = vrot.slane %v603, %v611
        %v615 = vmul.f32 %v525, %v608
        %v616 = vmul.f32 %v527, %v612
        %v617 = vmul.f32 %v529, %v608
        %v618 = vmul.f32 %v531, %v612
        %v619 = vmul.f32 %v535, %v608
        %v620 = vmul.f32 %v537, %v612
        %v621 = vmul.f32 %v539, %v608
        %v622 = vmul.f32 %v541, %v612
        %v623 = vmul.f32 %v545, %v608
        %v624 = vmul.f32 %v547, %v612
        %v625 = vmul.f32 %v549, %v608
        %v626 = vmul.f32 %v551, %v612
        %v627 = vmul.f32 %v555, %v608
        %v628 = vmul.f32 %v557, %v612
        %v629 = vmul.f32 %v559, %v608
        %v630 = vmul.f32 %v561, %v612
        %v631 = vmul.f32 %v565, %v608
        %v632 = vmul.f32 %v567, %v612
        %v633 = vmul.f32 %v569, %v608
        %v634 = vmul.f32 %v571, %v612
        %v635 = vmul.f32 %v575, %v608
        %v636 = vmul.f32 %v577, %v612
        %v637 = vmul.f32 %v579, %v608
        %v638 = vmul.f32 %v581, %v612
        %v639 = vmul.f32 %v585, %v608
        %v640 = vmul.f32 %v587, %v612
        %v641 = vmul.f32 %v589, %v608
        %v642 = vmul.f32 %v591, %v612
        %v643 = vmul.f32 %v595, %v608
        %v644 = vmul.f32 %v597, %v612
        %v645 = vmul.f32 %v599, %v608
        %v646 = vmul.f32 %v601, %v612
        %v647 = vld [vmem:[%s280] sm:$0x3]
        %v649 = vlaneseq
        %v650 = vshrl.u32 %v649, 7
        %v651 = vsub.s32 0, %v650
        %v652 = vrot.slane %v647, %v651
        %v653 = vlaneseq
        %v654 = vshrl.u32 %v653, 7
        %v655 = vsub.s32 1, %v654
        %v656 = vrot.slane %v647, %v655
        %v659 = vadd.f32 %v615, %v652
        %v660 = vadd.f32 %v616, %v656
        %v661 = vadd.f32 %v617, %v652
        %v662 = vadd.f32 %v618, %v656
        %v663 = vadd.f32 %v619, %v652
        %v664 = vadd.f32 %v620, %v656
        %v665 = vadd.f32 %v621, %v652
        %v666 = vadd.f32 %v622, %v656
        %v667 = vadd.f32 %v623, %v652
        %v668 = vadd.f32 %v624, %v656
        %v669 = vadd.f32 %v625, %v652
        %v670 = vadd.f32 %v626, %v656
        %v671 = vadd.f32 %v627, %v652
        %v672 = vadd.f32 %v628, %v656
        %v673 = vadd.f32 %v629, %v652
        %v674 = vadd.f32 %v630, %v656
        %v675 = vadd.f32 %v631, %v652
        %v676 = vadd.f32 %v632, %v656
        %v677 = vadd.f32 %v633, %v652
        %v678 = vadd.f32 %v634, %v656
        %v679 = vadd.f32 %v635, %v652
        %v680 = vadd.f32 %v636, %v656
        %v681 = vadd.f32 %v637, %v652
        %v682 = vadd.f32 %v638, %v656
        %v683 = vadd.f32 %v639, %v652
        %v684 = vadd.f32 %v640, %v656
        %v685 = vadd.f32 %v641, %v652
        %v686 = vadd.f32 %v642, %v656
        %v687 = vadd.f32 %v643, %v652
        %v688 = vadd.f32 %v644, %v656
        %v689 = vadd.f32 %v645, %v652
        %v690 = vadd.f32 %v646, %v656
        %v691 = vmax.f32 %v659, 0.0
        %v692 = vmax.f32 %v660, 0.0
        %v693 = vmax.f32 %v661, 0.0
        %v694 = vmax.f32 %v662, 0.0
        %v695 = vmax.f32 %v663, 0.0
        %v696 = vmax.f32 %v664, 0.0
        %v697 = vmax.f32 %v665, 0.0
        %v698 = vmax.f32 %v666, 0.0
        %v699 = vmax.f32 %v667, 0.0
        %v700 = vmax.f32 %v668, 0.0
        %v701 = vmax.f32 %v669, 0.0
        %v702 = vmax.f32 %v670, 0.0
        %v703 = vmax.f32 %v671, 0.0
        %v704 = vmax.f32 %v672, 0.0
        %v705 = vmax.f32 %v673, 0.0
        %v706 = vmax.f32 %v674, 0.0
        %v707 = vmax.f32 %v675, 0.0
        %v708 = vmax.f32 %v676, 0.0
        %v709 = vmax.f32 %v677, 0.0
        %v710 = vmax.f32 %v678, 0.0
        %v711 = vmax.f32 %v679, 0.0
        %v712 = vmax.f32 %v680, 0.0
        %v713 = vmax.f32 %v681, 0.0
        %v714 = vmax.f32 %v682, 0.0
        %v715 = vmax.f32 %v683, 0.0
        %v716 = vmax.f32 %v684, 0.0
        %v717 = vmax.f32 %v685, 0.0
        %v718 = vmax.f32 %v686, 0.0
        %v719 = vmax.f32 %v687, 0.0
        %v720 = vmax.f32 %v688, 0.0
        %v721 = vmax.f32 %v689, 0.0
        %v722 = vmax.f32 %v690, 0.0
        %v723 = vpack.c.bf16 %v693, %v691
        %v724 = vpack.c.bf16 %v694, %v692
        %v725 = vpack.c.bf16 %v697, %v695
        %v726 = vpack.c.bf16 %v698, %v696
        %v727 = vpack.c.bf16 %v701, %v699
        %v728 = vpack.c.bf16 %v702, %v700
        %v729 = vpack.c.bf16 %v705, %v703
        %v730 = vpack.c.bf16 %v706, %v704
        %v731 = vpack.c.bf16 %v709, %v707
        %v732 = vpack.c.bf16 %v710, %v708
        %v733 = vpack.c.bf16 %v713, %v711
        %v734 = vpack.c.bf16 %v714, %v712
        %v735 = vpack.c.bf16 %v717, %v715
        %v736 = vpack.c.bf16 %v718, %v716
        %v737 = vpack.c.bf16 %v721, %v719
        %v738 = vpack.c.bf16 %v722, %v720
        %v755 = vunpack.c.l.b16 %v723
        %v756 = vunpack.c.l.b16 %v724
        %v757 = vunpack.c.h.b16 %v723
        %v758 = vunpack.c.h.b16 %v724
        %v759 = vunpack.c.l.b16 %v725
        %v760 = vunpack.c.l.b16 %v726
        %v761 = vunpack.c.h.b16 %v725
        %v762 = vunpack.c.h.b16 %v726
        %v763 = vunpack.c.l.b16 %v727
        %v764 = vunpack.c.l.b16 %v728
        %v765 = vunpack.c.h.b16 %v727
        %v766 = vunpack.c.h.b16 %v728
        %v767 = vunpack.c.l.b16 %v729
        %v768 = vunpack.c.l.b16 %v730
        %v769 = vunpack.c.h.b16 %v729
        %v770 = vunpack.c.h.b16 %v730
        %v771 = vunpack.c.l.b16 %v731
        %v772 = vunpack.c.l.b16 %v732
        %v773 = vunpack.c.h.b16 %v731
        %v774 = vunpack.c.h.b16 %v732
        %v775 = vunpack.c.l.b16 %v733
        %v776 = vunpack.c.l.b16 %v734
        %v777 = vunpack.c.h.b16 %v733
        %v778 = vunpack.c.h.b16 %v734
        %v779 = vunpack.c.l.b16 %v735
        %v780 = vunpack.c.l.b16 %v736
        %v781 = vunpack.c.h.b16 %v735
        %v782 = vunpack.c.h.b16 %v736
        %v783 = vunpack.c.l.b16 %v737
        %v784 = vunpack.c.l.b16 %v738
        %v785 = vunpack.c.h.b16 %v737
        %v786 = vunpack.c.h.b16 %v738
        %v787 = vpack.c.b16 %v756, %v755
        %v788 = vpack.c.b16 %v758, %v757
        %v789 = vpack.c.b16 %v760, %v759
        %v790 = vpack.c.b16 %v762, %v761
        %v791 = vpack.c.b16 %v764, %v763
        %v792 = vpack.c.b16 %v766, %v765
        %v793 = vpack.c.b16 %v768, %v767
        %v794 = vpack.c.b16 %v770, %v769
        %v795 = vpack.c.b16 %v772, %v771
        %v796 = vpack.c.b16 %v774, %v773
        %v797 = vpack.c.b16 %v776, %v775
        %v798 = vpack.c.b16 %v778, %v777
        %v799 = vpack.c.b16 %v780, %v779
        %v800 = vpack.c.b16 %v782, %v781
        %v801 = vpack.c.b16 %v784, %v783
        %v802 = vpack.c.b16 %v786, %v785
        %819 = vst [vmem:[%s318] sm:$0xff] %v787
        %820 = vst [vmem:[%s318 + $0x8] sm:$0xff] %v788
        %821 = vst [vmem:[%s318 + $0x10] sm:$0xff] %v789
        %822 = vst [vmem:[%s318 + $0x18] sm:$0xff] %v790
        %823 = vst [vmem:[%s318 + $0x20] sm:$0xff] %v791
        %824 = vst [vmem:[%s318 + $0x28] sm:$0xff] %v792
        %825 = vst [vmem:[%s318 + $0x30] sm:$0xff] %v793
        %826 = vst [vmem:[%s318 + $0x38] sm:$0xff] %v794
        %827 = vst [vmem:[%s318 + $0x40] sm:$0xff] %v795
        %828 = vst [vmem:[%s318 + $0x48] sm:$0xff] %v796
        %829 = vst [vmem:[%s318 + $0x50] sm:$0xff] %v797
        %830 = vst [vmem:[%s318 + $0x58] sm:$0xff] %v798
        %831 = vst [vmem:[%s318 + $0x60] sm:$0xff] %v799
        %832 = vst [vmem:[%s318 + $0x68] sm:$0xff] %v800
        %833 = vst [vmem:[%s318 + $0x70] sm:$0xff] %v801
        %834 = vst [vmem:[%s318 + $0x78] sm:$0xff] %v802
        %s835 = sand.u32 %s150, 1
        %s836 = scalar_lea.sflag [#allocation4], %s835
        %s837 = sand.u32 %s150, 1
        %s838 = smul.addr %s837, 128
        %s839 = scalar_lea.vmem [#allocation8], %s838
        // Predicated region
        $region49: #{tpu_custom_call.1} parent=35 // pred_check
          %p840 = pneg %p160
        $region50: #{tpu_custom_call.1} parent=35 // pred_check_branch
          %842 = sbr.rel (%p840) target = $region52
        $region51: #{tpu_custom_call.1} parent=35 // pred_region
          %s843 = smul.u32 16, %s28
          %s844 = smul.u32 2, %s29
          %s846 = ssub.s32 2048, 2048
          %847 = vsyncadd %s836, %s846
          %s848 = smul.addr %s843, 6
          %s849 = sadd.s32 %s844, %s848
          %s850 = smul.addr %s849, 64
          %s851 = scalar_lea.hbm %s4, %s850
          %s852 = sshll.u32 %s839, 4
          %s853 = int_to_ptr.vmem [resolvable:$true] %s852
          %858 = dma.vmem_to_hbm [thread:$0]  %s853, 2048, %s851, %s836, 128, 384, 8
        $region52: #{tpu_custom_call.1} parent=35 // pred_fallthru
          _
      $region36: #{tpu_custom_call.1} parent=5 // pred_fallthru
        _
      %p859 = scmp.le.s32.totalorder 2, %s19
      // Predicated region
      $region53: #{tpu_custom_call.1} parent=5 // pred_check
        %p860 = pneg %p859
      $region54: #{tpu_custom_call.1} parent=5 // pred_check_branch
        %862 = sbr.rel (%p860) target = $region56
      $region55: #{tpu_custom_call.1} parent=5 // pred_region
        %s863 = ssub.s32 %s19, 2
        // Predicated region
        $region57: #{tpu_custom_call.1} parent=55 // pred_check
          %p864 = pneg %p166
        $region58: #{tpu_custom_call.1} parent=55 // pred_check_branch
          %866 = sbr.rel (%p864) target = $region60
        $region59: #{tpu_custom_call.1} parent=55 // pred_region
          %s867 = sand.u32 %s151, 1
          %s868 = scalar_lea.sflag [#allocation4], %s867
          %s869 = sand.u32 %s151, 1
          %s870 = smul.addr %s869, 128
          %s871 = scalar_lea.vmem [#allocation8], %s870
          %872 = dma.done %s868, 2048
        $region60: #{tpu_custom_call.1} parent=55 // pred_fallthru
          _
      $region56: #{tpu_custom_call.1} parent=5 // pred_fallthru
        _
    $region6: #{tpu_custom_call.1} parent=1 // loop_footer
      %s23 = sadd.s32 1, %s19
    $region7: #{tpu_custom_call.1} parent=1 // loop_footer_branch
      %18 = sbr.rel target = $region3
    $region8: #{tpu_custom_call.1} parent=1 // loop_exit
      _
    %873 = vsyncpa [#allocation3], 1
    %s874 = scalar_lea.sflag [#allocation3], 1
    %875 = vsyncpa %s874, 1
    %876 = vsyncpa [#allocation6], 1
    %s877 = scalar_lea.sflag [#allocation6], 1
    %878 = vsyncpa %s877, 1
    %879 = vsyncpa [#allocation4], 1
    %s880 = scalar_lea.sflag [#allocation4], 1
    %881 = vsyncpa %s880, 1

</llo_original>
